<compile_context>
chip_gen: v7x
topology: tpu7x:2x2x1
jax: 0.10.0
libtpu: 0.0.40
codegen_flags: <defaults>
</compile_context>

<pallas_src>
import jax
import jax.numpy as jnp
from jax import lax
from jax.experimental import pallas as pl
from jax.experimental.pallas import tpu as pltpu


LAYERS = [64, 32, 16, 8]            # matches default layers=[64, 32, 16, 8]
EMB_DIM = LAYERS[0] // 2            # 32 per embedding table
MAX_BATCH_TILE = 8192               # rows per grid step (multiple of 256)
VMEM_LIMIT_BYTES = 48 * 1024 * 1024 # explicit scoped-VMEM cap (> v5e 16 MiB
                                    # default, < v7x 64 MiB physical per TC)

# dot_general dimension numbers for A @ B^T (contract last dim of both).
_NT_DIMS = (((1,), (1,)), ((), ()))


def _cdiv(a, b):
    return -(-a // b)


def _round_up(x, m):
    return (x + m - 1) // m * m


def _choose_batch_tile(batch):
    """Batch rows per grid step.

    Aims for >=2 grid steps (v7x megacore) while capping the per-step VMEM
    footprint; never exceeds the batch itself so block dims stay <= array dims.
    """
    tile = min(MAX_BATCH_TILE, _round_up(_cdiv(batch, 2), 256))
    return max(1, min(tile, batch))


def mlp_kernel(u_ref, v_ref,
               w1u_ref, w1v_ref, b1_ref,
               w2_ref, b2_ref,
               w3_ref, b3_ref,
               w4_ref, b4_ref,
               wp_ref, bp_ref,
               out_ref):
    """One batch tile of the fused 4-layer MLP tower + prediction head.

    u_ref, v_ref : (T, 32) bf16   user/item latents, streamed per grid step
    w1u/w1v      : (32, 64) bf16  split halves of W1 (concat-free layer 1)
    w2/w3/w4     : (in, out) bf16 weights, VMEM-resident (constant index_map)
    b1..b4       : (1, out) f32   biases
    wp_ref       : (8, 8)  bf16   prediction weights, row 0 real, rows 1-7 zero
    bp_ref       : (1, 1)  f32    prediction bias
    out_ref      : (1, 1, T) f32  lane-dense prediction row for this tile
    """
    f32 = jnp.float32

    # Layer 1 on the split inputs: relu([u | v] @ W1 + b1) == relu(u@W1u + v@W1v + b1).
    acc = jnp.dot(u_ref[...], w1u_ref[...], preferred_element_type=f32)
    acc = acc + jnp.dot(v_ref[...], w1v_ref[...], preferred_element_type=f32)
    h = jnp.maximum(acc + b1_ref[...], 0.0).astype(jnp.bfloat16)        # (T, 64)

    def dense_relu(x, w_ref, b_ref):
        a = jnp.dot(x, w_ref[...], preferred_element_type=f32)
        return jnp.maximum(a + b_ref[...], 0.0).astype(jnp.bfloat16)

    h = dense_relu(h, w2_ref, b2_ref)                                   # (T, 32)
    h = dense_relu(h, w3_ref, b3_ref)                                   # (T, 16)
    h = dense_relu(h, w4_ref, b4_ref)                                   # (T, 8)

    # Prediction head, produced lane-dense on the MXU: wp_pad @ h^T -> (8, T);
    # only row 0 carries real weights.  Avoids a (T, 1) column result and any
    # in-kernel sublane->lane relayout.
    pred = lax.dot_general(wp_ref[...], h, _NT_DIMS,
                           preferred_element_type=f32)                  # (8, T)
    pred = pred[0:1, :] + bp_ref[...]                                   # (1, T)
    out_ref[...] = pred.reshape(out_ref.shape)


def init_params(key, num_users, num_items, layers=LAYERS):
    """Deterministic init mirroring the PyTorch module (bf16 storage, f32 bias)."""
    dim = layers[0] // 2
    layer_sizes = [layers[0]] + layers          # [64, 64, 32, 16, 8]
    n_fc = len(layer_sizes) - 1
    keys = jax.random.split(key, 2 + 2 * n_fc + 2)
    ki = iter(keys)

    params = {
        "user_emb": (jax.random.normal(next(ki), (num_users, dim), jnp.float32)
                     * 0.1).astype(jnp.bfloat16),
        "item_emb": (jax.random.normal(next(ki), (num_items, dim), jnp.float32)
                     * 0.1).astype(jnp.bfloat16),
    }

    fc = []
    for i in range(1, len(layer_sizes)):
        fan_in, fan_out = layer_sizes[i - 1], layer_sizes[i]
        w = (jax.random.normal(next(ki), (fan_in, fan_out), jnp.float32)
             * (1.0 / jnp.sqrt(fan_in))).astype(jnp.bfloat16)   # stored (in, out)
        b = jax.random.normal(next(ki), (1, fan_out), jnp.float32) * 0.01
        fc.append((w, b))
    params["fc"] = fc

    wp = (jax.random.normal(next(ki), (1, layers[-1]), jnp.float32)
          * (1.0 / jnp.sqrt(layers[-1]))).astype(jnp.bfloat16)  # (1, 8) row vector
    bp = jax.random.normal(next(ki), (1, 1), jnp.float32) * 0.01
    params["pred"] = (wp, bp)
    return params


def mlp_forward(params, user_input, item_input):
    """Embedding gather (glue) + batch-tiled fused Pallas MLP kernel."""
    # Embedding lookups stay as wrapper glue (data-dependent gather); they are
    # streamed into the kernel separately — no concat materialization.
    user_latent = jnp.take(params["user_emb"], user_input, axis=0)   # (B, 32) bf16
    item_latent = jnp.take(params["item_emb"], item_input, axis=0)   # (B, 32) bf16

    B = user_latent.shape[0]
    b_tile = _choose_batch_tile(B)
    n_tiles = _cdiv(B, b_tile)           # ragged last tile handled by Pallas

    (w1, b1), (w2, b2), (w3, b3), (w4, b4) = params["fc"]
    wp, bp = params["pred"]
    # Split W1 so layer 1 consumes the two latents directly (no concat).
    w1u, w1v = w1[:EMB_DIM], w1[EMB_DIM:]
    # Pad the head weights to a full 8-row sublane tile; row 0 is real.
    wp_pad = jnp.pad(wp, ((0, 8 - wp.shape[0]), (0, 0)))

    weights = [w1u, w1v, b1, w2, b2, w3, b3, w4, b4, wp_pad, bp]

    act_spec = pl.BlockSpec((b_tile, EMB_DIM), lambda i: (i, 0))

    def resident(a):
        # Whole array, constant block index -> stays VMEM-resident across steps.
        return pl.BlockSpec(a.shape, lambda i, _nd=a.ndim: (0,) * _nd)

    out = pl.pallas_call(
        mlp_kernel,
        out_shape=jax.ShapeDtypeStruct((n_tiles, 1, b_tile), jnp.float32),
        grid=(n_tiles,),
        in_specs=[act_spec, act_spec] + [resident(a) for a in weights],
        out_specs=pl.BlockSpec((1, 1, b_tile), lambda i: (i, 0, 0)),
        compiler_params=pltpu.CompilerParams(
            dimension_semantics=("parallel",),        # megacore sharding on v7x
            vmem_limit_bytes=VMEM_LIMIT_BYTES),
    )(user_latent, item_latent, *weights)

    # (n_tiles, 1, T) lane-dense slab -> (B, 1); garbage tail rows discarded.
    return out.reshape(n_tiles * b_tile, 1)[:B]


mlp_forward_jit = jax.jit(mlp_forward)


def reference_forward(params, user_input, item_input):
    """Plain-JAX reference with the same precision policy (bf16 in, f32 acc)."""
    ul = jnp.take(params["user_emb"], user_input, axis=0)
    il = jnp.take(params["item_emb"], item_input, axis=0)
    h = jnp.concatenate([ul, il], axis=-1)                           # (B, 64) bf16
    for w, b in params["fc"]:
        h = jnp.maximum(
            jnp.dot(h, w, preferred_element_type=jnp.float32) + b, 0.0)
        h = h.astype(jnp.bfloat16)
    wp, bp = params["pred"]
    return jnp.dot(h, wp.T, preferred_element_type=jnp.float32) + bp


if __name__ == "__main__":
    num_users, num_items = 10, 12

    key = jax.random.PRNGKey(0)
    k_params, k_user, k_item = jax.random.split(key, 3)
    params = init_params(k_params, num_users, num_items)

    # Case 1: tiny batch (single tile).
    batch = 8
    user_input = jax.random.randint(k_user, (batch,), 0, num_users, dtype=jnp.int32)
    item_input = jax.random.randint(k_item, (batch,), 0, num_items, dtype=jnp.int32)
    pred = jax.block_until_ready(mlp_forward_jit(params, user_input, item_input))
    ref = jax.block_until_ready(reference_forward(params, user_input, item_input))
    assert pred.shape == (batch, 1), pred.shape
    assert jnp.allclose(pred, ref, atol=1e-3, rtol=1e-3), (pred, ref)

    # Case 2: multi-tile batch with a ragged last block (exercises the
    # parallel grid and the partial-tile path; tail rows are discarded).
    batch2 = 600
    k_user2, k_item2 = jax.random.split(jax.random.PRNGKey(1))
    user_input2 = jax.random.randint(k_user2, (batch2,), 0, num_users, dtype=jnp.int32)
    item_input2 = jax.random.randint(k_item2, (batch2,), 0, num_items, dtype=jnp.int32)
    pred2 = jax.block_until_ready(mlp_forward_jit(params, user_input2, item_input2))
    ref2 = jax.block_until_ready(reference_forward(params, user_input2, item_input2))
    assert pred2.shape == (batch2, 1), pred2.shape
    assert jnp.allclose(pred2, ref2, atol=1e-3, rtol=1e-3)

    print("KERNEL_OK")
</pallas_src>

<mosaic_0001>
module attributes {stable_mosaic.version = 11 : i64} {
  func.func @mlp_kernel(%arg0: i32, %arg1: memref<8x32xbf16, #tpu.memory_space<vmem>>, %arg2: memref<8x32xbf16, #tpu.memory_space<vmem>>, %arg3: memref<32x64xbf16, #tpu.memory_space<vmem>>, %arg4: memref<32x64xbf16, #tpu.memory_space<vmem>>, %arg5: memref<1x64xf32, #tpu.memory_space<vmem>>, %arg6: memref<64x32xbf16, #tpu.memory_space<vmem>>, %arg7: memref<1x32xf32, #tpu.memory_space<vmem>>, %arg8: memref<32x16xbf16, #tpu.memory_space<vmem>>, %arg9: memref<1x16xf32, #tpu.memory_space<vmem>>, %arg10: memref<16x8xbf16, #tpu.memory_space<vmem>>, %arg11: memref<1x8xf32, #tpu.memory_space<vmem>>, %arg12: memref<8x8xbf16, #tpu.memory_space<vmem>>, %arg13: memref<1x1xf32, #tpu.memory_space<vmem>>, %arg14: memref<1x1x8xf32, #tpu.memory_space<vmem>>) attributes {dimension_semantics = [#tpu.dimension_semantics<parallel>], iteration_bounds = array<i64: 1>, scalar_prefetch = 0 : i64, scratch_operands = 0 : i64, tpu.core_type = #tpu.core_type<tc>, window_params = [{transform_indices = @transform_0, window_bounds = array<i64: 8, 32>}, {transform_indices = @transform_1, window_bounds = array<i64: 8, 32>}, {pipeline_mode = #tpu.pipeline_mode<synchronous>, transform_indices = @transform_2, window_bounds = array<i64: 32, 64>}, {pipeline_mode = #tpu.pipeline_mode<synchronous>, transform_indices = @transform_3, window_bounds = array<i64: 32, 64>}, {pipeline_mode = #tpu.pipeline_mode<synchronous>, transform_indices = @transform_4, window_bounds = array<i64: 1, 64>}, {pipeline_mode = #tpu.pipeline_mode<synchronous>, transform_indices = @transform_5, window_bounds = array<i64: 64, 32>}, {pipeline_mode = #tpu.pipeline_mode<synchronous>, transform_indices = @transform_6, window_bounds = array<i64: 1, 32>}, {pipeline_mode = #tpu.pipeline_mode<synchronous>, transform_indices = @transform_7, window_bounds = array<i64: 32, 16>}, {pipeline_mode = #tpu.pipeline_mode<synchronous>, transform_indices = @transform_8, window_bounds = array<i64: 1, 16>}, {pipeline_mode = #tpu.pipeline_mode<synchronous>, transform_indices = @transform_9, window_bounds = array<i64: 16, 8>}, {pipeline_mode = #tpu.pipeline_mode<synchronous>, transform_indices = @transform_10, window_bounds = array<i64: 1, 8>}, {pipeline_mode = #tpu.pipeline_mode<synchronous>, transform_indices = @transform_11, window_bounds = array<i64: 8, 8>}, {pipeline_mode = #tpu.pipeline_mode<synchronous>, transform_indices = @transform_12, window_bounds = array<i64: 1, 1>}, {transform_indices = @transform_13, window_bounds = array<i64: 1, 1, 8>}]} {
    %c0 = arith.constant 0 : index
    %c0_0 = arith.constant 0 : index
    %0 = vector.load %arg1[%c0, %c0_0] : memref<8x32xbf16, #tpu.memory_space<vmem>>, vector<8x32xbf16>
    %c0_1 = arith.constant 0 : index
    %c0_2 = arith.constant 0 : index
    %1 = vector.load %arg3[%c0_1, %c0_2] : memref<32x64xbf16, #tpu.memory_space<vmem>>, vector<32x64xbf16>
    %cst = arith.constant dense<0.000000e+00> : vector<8x64xf32>
    %2 = tpu.matmul %0, %1, %cst {dimension_numbers = #tpu.dot_dimension_numbers<[1], [0], [0], [1], [0, 0, 1, 1], [], []>} : vector<8x32xbf16>, vector<32x64xbf16>, vector<8x64xf32> -> vector<8x64xf32>
    %c0_3 = arith.constant 0 : index
    %c0_4 = arith.constant 0 : index
    %3 = vector.load %arg2[%c0_3, %c0_4] : memref<8x32xbf16, #tpu.memory_space<vmem>>, vector<8x32xbf16>
    %c0_5 = arith.constant 0 : index
    %c0_6 = arith.constant 0 : index
    %4 = vector.load %arg4[%c0_5, %c0_6] : memref<32x64xbf16, #tpu.memory_space<vmem>>, vector<32x64xbf16>
    %cst_7 = arith.constant dense<0.000000e+00> : vector<8x64xf32>
    %5 = tpu.matmul %3, %4, %cst_7 {dimension_numbers = #tpu.dot_dimension_numbers<[1], [0], [0], [1], [0, 0, 1, 1], [], []>} : vector<8x32xbf16>, vector<32x64xbf16>, vector<8x64xf32> -> vector<8x64xf32>
    %6 = arith.addf %2, %5 : vector<8x64xf32>
    %c0_8 = arith.constant 0 : index
    %c0_9 = arith.constant 0 : index
    %7 = vector.load %arg5[%c0_8, %c0_9] : memref<1x64xf32, #tpu.memory_space<vmem>>, vector<1x64xf32>
    %8 = vector.broadcast %7 : vector<1x64xf32> to vector<8x64xf32>
    %9 = arith.addf %6, %8 : vector<8x64xf32>
    %cst_10 = arith.constant 0.000000e+00 : f32
    %10 = vector.broadcast %cst_10 : f32 to vector<8x64xf32>
    %11 = arith.maximumf %9, %10 : vector<8x64xf32>
    %12 = arith.truncf %11 : vector<8x64xf32> to vector<8x64xbf16>
    %c0_11 = arith.constant 0 : index
    %c0_12 = arith.constant 0 : index
    %13 = vector.load %arg6[%c0_11, %c0_12] : memref<64x32xbf16, #tpu.memory_space<vmem>>, vector<64x32xbf16>
    %cst_13 = arith.constant dense<0.000000e+00> : vector<8x32xf32>
    %14 = tpu.matmul %12, %13, %cst_13 {dimension_numbers = #tpu.dot_dimension_numbers<[1], [0], [0], [1], [0, 0, 1, 1], [], []>} : vector<8x64xbf16>, vector<64x32xbf16>, vector<8x32xf32> -> vector<8x32xf32>
    %c0_14 = arith.constant 0 : index
    %c0_15 = arith.constant 0 : index
    %15 = vector.load %arg7[%c0_14, %c0_15] : memref<1x32xf32, #tpu.memory_space<vmem>>, vector<1x32xf32>
    %16 = vector.broadcast %15 : vector<1x32xf32> to vector<8x32xf32>
    %17 = arith.addf %14, %16 : vector<8x32xf32>
    %cst_16 = arith.constant 0.000000e+00 : f32
    %18 = vector.broadcast %cst_16 : f32 to vector<8x32xf32>
    %19 = arith.maximumf %17, %18 : vector<8x32xf32>
    %20 = arith.truncf %19 : vector<8x32xf32> to vector<8x32xbf16>
    %c0_17 = arith.constant 0 : index
    %c0_18 = arith.constant 0 : index
    %21 = vector.load %arg8[%c0_17, %c0_18] : memref<32x16xbf16, #tpu.memory_space<vmem>>, vector<32x16xbf16>
    %cst_19 = arith.constant dense<0.000000e+00> : vector<8x16xf32>
    %22 = tpu.matmul %20, %21, %cst_19 {dimension_numbers = #tpu.dot_dimension_numbers<[1], [0], [0], [1], [0, 0, 1, 1], [], []>} : vector<8x32xbf16>, vector<32x16xbf16>, vector<8x16xf32> -> vector<8x16xf32>
    %c0_20 = arith.constant 0 : index
    %c0_21 = arith.constant 0 : index
    %23 = vector.load %arg9[%c0_20, %c0_21] : memref<1x16xf32, #tpu.memory_space<vmem>>, vector<1x16xf32>
    %24 = vector.broadcast %23 : vector<1x16xf32> to vector<8x16xf32>
    %25 = arith.addf %22, %24 : vector<8x16xf32>
    %cst_22 = arith.constant 0.000000e+00 : f32
    %26 = vector.broadcast %cst_22 : f32 to vector<8x16xf32>
    %27 = arith.maximumf %25, %26 : vector<8x16xf32>
    %28 = arith.truncf %27 : vector<8x16xf32> to vector<8x16xbf16>
    %c0_23 = arith.constant 0 : index
    %c0_24 = arith.constant 0 : index
    %29 = vector.load %arg10[%c0_23, %c0_24] : memref<16x8xbf16, #tpu.memory_space<vmem>>, vector<16x8xbf16>
    %cst_25 = arith.constant dense<0.000000e+00> : vector<8x8xf32>
    %30 = tpu.matmul %28, %29, %cst_25 {dimension_numbers = #tpu.dot_dimension_numbers<[1], [0], [0], [1], [0, 0, 1, 1], [], []>} : vector<8x16xbf16>, vector<16x8xbf16>, vector<8x8xf32> -> vector<8x8xf32>
    %c0_26 = arith.constant 0 : index
    %c0_27 = arith.constant 0 : index
    %31 = vector.load %arg11[%c0_26, %c0_27] : memref<1x8xf32, #tpu.memory_space<vmem>>, vector<1x8xf32>
    %32 = vector.broadcast %31 : vector<1x8xf32> to vector<8x8xf32>
    %33 = arith.addf %30, %32 : vector<8x8xf32>
    %cst_28 = arith.constant 0.000000e+00 : f32
    %34 = vector.broadcast %cst_28 : f32 to vector<8x8xf32>
    %35 = arith.maximumf %33, %34 : vector<8x8xf32>
    %36 = arith.truncf %35 : vector<8x8xf32> to vector<8x8xbf16>
    %c0_29 = arith.constant 0 : index
    %c0_30 = arith.constant 0 : index
    %37 = vector.load %arg12[%c0_29, %c0_30] : memref<8x8xbf16, #tpu.memory_space<vmem>>, vector<8x8xbf16>
    %cst_31 = arith.constant dense<0.000000e+00> : vector<8x8xf32>
    %38 = tpu.matmul %37, %36, %cst_31 {dimension_numbers = #tpu.dot_dimension_numbers<[1], [1], [0], [0], [0, 0, 1, 0], [], []>} : vector<8x8xbf16>, vector<8x8xbf16>, vector<8x8xf32> -> vector<8x8xf32>
    %39 = vector.extract_strided_slice %38 {offsets = [0, 0], sizes = [1, 8], strides = [1, 1]} : vector<8x8xf32> to vector<1x8xf32>
    %c0_32 = arith.constant 0 : index
    %c0_33 = arith.constant 0 : index
    %40 = vector.load %arg13[%c0_32, %c0_33] : memref<1x1xf32, #tpu.memory_space<vmem>>, vector<1x1xf32>
    %41 = vector.broadcast %40 : vector<1x1xf32> to vector<1x8xf32>
    %42 = arith.addf %39, %41 : vector<1x8xf32>
    %43 = vector.shape_cast %42 : vector<1x8xf32> to vector<1x1x8xf32>
    %c0_34 = arith.constant 0 : index
    %c0_35 = arith.constant 0 : index
    %c0_36 = arith.constant 0 : index
    %44 = vector.load %arg14[%c0_34, %c0_35, %c0_36] : memref<1x1x8xf32, #tpu.memory_space<vmem>>, vector<1x1x8xf32>
    tpu.vector_store %arg14[%c0_34, %c0_35, %c0_36], %43 {strides = array<i32>} : memref<1x1x8xf32, #tpu.memory_space<vmem>>, vector<1x1x8xf32>,
    return
  }
  func.func @transform_0(%arg0: i32) -> (i32, i32) {
    %c0_i32 = arith.constant 0 : i32
    %c0_i32_0 = arith.constant 0 : i32
    return %arg0, %c0_i32 : i32, i32
  }
  func.func @transform_1(%arg0: i32) -> (i32, i32) {
    %c0_i32 = arith.constant 0 : i32
    %c0_i32_0 = arith.constant 0 : i32
    return %arg0, %c0_i32 : i32, i32
  }
  func.func @transform_2(%arg0: i32) -> (i32, i32) {
    %c0_i32 = arith.constant 0 : i32
    %c0_i32_0 = arith.constant 0 : i32
    %c0_i32_1 = arith.constant 0 : i32
    return %c0_i32, %c0_i32_0 : i32, i32
  }
  func.func @transform_3(%arg0: i32) -> (i32, i32) {
    %c0_i32 = arith.constant 0 : i32
    %c0_i32_0 = arith.constant 0 : i32
    %c0_i32_1 = arith.constant 0 : i32
    return %c0_i32, %c0_i32_0 : i32, i32
  }
  func.func @transform_4(%arg0: i32) -> (i32, i32) {
    %c0_i32 = arith.constant 0 : i32
    %c0_i32_0 = arith.constant 0 : i32
    %c0_i32_1 = arith.constant 0 : i32
    return %c0_i32, %c0_i32_0 : i32, i32
  }
  func.func @transform_5(%arg0: i32) -> (i32, i32) {
    %c0_i32 = arith.constant 0 : i32
    %c0_i32_0 = arith.constant 0 : i32
    %c0_i32_1 = arith.constant 0 : i32
    return %c0_i32, %c0_i32_0 : i32, i32
  }
  func.func @transform_6(%arg0: i32) -> (i32, i32) {
    %c0_i32 = arith.constant 0 : i32
    %c0_i32_0 = arith.constant 0 : i32
    %c0_i32_1 = arith.constant 0 : i32
    return %c0_i32, %c0_i32_0 : i32, i32
  }
  func.func @transform_7(%arg0: i32) -> (i32, i32) {
    %c0_i32 = arith.constant 0 : i32
    %c0_i32_0 = arith.constant 0 : i32
    %c0_i32_1 = arith.constant 0 : i32
    return %c0_i32, %c0_i32_0 : i32, i32
  }
  func.func @transform_8(%arg0: i32) -> (i32, i32) {
    %c0_i32 = arith.constant 0 : i32
    %c0_i32_0 = arith.constant 0 : i32
    %c0_i32_1 = arith.constant 0 : i32
    return %c0_i32, %c0_i32_0 : i32, i32
  }
  func.func @transform_9(%arg0: i32) -> (i32, i32) {
    %c0_i32 = arith.constant 0 : i32
    %c0_i32_0 = arith.constant 0 : i32
    %c0_i32_1 = arith.constant 0 : i32
    return %c0_i32, %c0_i32_0 : i32, i32
  }
  func.func @transform_10(%arg0: i32) -> (i32, i32) {
    %c0_i32 = arith.constant 0 : i32
    %c0_i32_0 = arith.constant 0 : i32
    %c0_i32_1 = arith.constant 0 : i32
    return %c0_i32, %c0_i32_0 : i32, i32
  }
  func.func @transform_11(%arg0: i32) -> (i32, i32) {
    %c0_i32 = arith.constant 0 : i32
    %c0_i32_0 = arith.constant 0 : i32
    %c0_i32_1 = arith.constant 0 : i32
    return %c0_i32, %c0_i32_0 : i32, i32
  }
  func.func @transform_12(%arg0: i32) -> (i32, i32) {
    %c0_i32 = arith.constant 0 : i32
    %c0_i32_0 = arith.constant 0 : i32
    %c0_i32_1 = arith.constant 0 : i32
    return %c0_i32, %c0_i32_0 : i32, i32
  }
  func.func @transform_13(%arg0: i32) -> (i32, i32, i32) {
    %c0_i32 = arith.constant 0 : i32
    %c0_i32_0 = arith.constant 0 : i32
    %c0_i32_1 = arith.constant 0 : i32
    return %arg0, %c0_i32, %c0_i32_0 : i32, i32, i32
  }
}

</mosaic_0001>

<llo_original>
// kernel: mlp_forward.1
$region0: #{mlp_forward.1}
  #allocation0 [shape = 'u32[]', space=smem, size = 0x4, offset = 0x4, fixed_abs, tag = 'smem constant byte address 0x4 - core index']
  #allocation1 [shape = 'u32[144,128]{1,0:T(1,128)}', space=vmem, size = 0x12000, scoped, tag = 'internal scratch']
  #allocation2 [shape = 'f32[1,1]{1,0:T(1,128)S(1)}', space=vmem, size = 0x200, scoped, tag = 'scoped memory for mlp_forward.1']
  %s0 = inlined_call_operand.vmem [shape: bf16[8,32], index: 0, kind: input, shape index: {}]
  %s1 = inlined_call_operand.vmem [shape: bf16[8,32], index: 1, kind: input, shape index: {}]
  %s2 = inlined_call_operand.vmem [shape: bf16[32,64], index: 2, kind: input, shape index: {}]
  %s3 = inlined_call_operand.vmem [shape: bf16[32,64], index: 3, kind: input, shape index: {}]
  %s4 = inlined_call_operand.vmem [shape: f32[1,64], index: 4, kind: input, shape index: {}]
  %s5 = inlined_call_operand.vmem [shape: bf16[64,32], index: 5, kind: input, shape index: {}]
  %s6 = inlined_call_operand.vmem [shape: f32[1,32], index: 6, kind: input, shape index: {}]
  %s7 = inlined_call_operand.vmem [shape: bf16[32,16], index: 7, kind: input, shape index: {}]
  %s8 = inlined_call_operand.vmem [shape: f32[1,16], index: 8, kind: input, shape index: {}]
  %s9 = inlined_call_operand.vmem [shape: bf16[16,8], index: 9, kind: input, shape index: {}]
  %s10 = inlined_call_operand.vmem [shape: f32[1,8], index: 10, kind: input, shape index: {}]
  %s11 = inlined_call_operand.vmem [shape: bf16[8,8], index: 11, kind: input, shape index: {}]
  %s12 = inlined_call_operand.<no memory space> [shape: f32[1,1], index: 12, kind: input, shape index: {}]
  %s13 = inlined_call_operand.hbm [shape: f32[1,1,8], index: 13, kind: output, shape index: {}]
  %s14 = sld [smem:[#allocation0]]
  $region62: #{mlp_forward.1} parent=0
    _
  %s16 = ssub.s32 1, %s14
  %s17 = scalar_select 0, %s16, %s14
  %v18 = vstv %s12
  %19 = vst [vmem:[#allocation2] sm:$0x1] %v18
  $region1: #{mlp_forward.1} parent=0
    #allocation3 [shape = 'u8[512]{0}', space=vmem, size = 0x400, scoped, tag = 'output window, operand 0, single buffered']
    #allocation4 [shape = 's32[1]{0}', space=sflag, size = 0x4, scoped, tag = 'scoped memory for mlp_forward.1']
    %20 = vsyncpa [#allocation4], 0
    // Predicated region
    $region2: #{mlp_forward.1} parent=1 // pred_check
      _
    $region3: #{mlp_forward.1} parent=1 // pred_check_branch
      %22 = sbr.rel (0) target = $region5
    $region4: #{mlp_forward.1} parent=1 // pred_region
      _
    $region5: #{mlp_forward.1} parent=1 // pred_fallthru
      _
    // Predicated region
    $region6: #{mlp_forward.1} parent=1 // pred_check
      _
    $region7: #{mlp_forward.1} parent=1 // pred_check_branch
      %24 = sbr.rel (0) target = $region9
    $region8: #{mlp_forward.1} parent=1 // pred_region
      _
    $region9: #{mlp_forward.1} parent=1 // pred_fallthru
      _
    // Predicated region
    $region10: #{mlp_forward.1} parent=1 // pred_check
      _
    $region11: #{mlp_forward.1} parent=1 // pred_check_branch
      %26 = sbr.rel (0) target = $region13
    $region12: #{mlp_forward.1} parent=1 // pred_region
      _
    $region13: #{mlp_forward.1} parent=1 // pred_fallthru
      _
    // Predicated region
    $region14: #{mlp_forward.1} parent=1 // pred_check
      _
    $region15: #{mlp_forward.1} parent=1 // pred_check_branch
      %28 = sbr.rel (0) target = $region17
    $region16: #{mlp_forward.1} parent=1 // pred_region
      _
    $region17: #{mlp_forward.1} parent=1 // pred_fallthru
      _
    // Predicated region
    $region18: #{mlp_forward.1} parent=1 // pred_check
      _
    $region19: #{mlp_forward.1} parent=1 // pred_check_branch
      %30 = sbr.rel (0) target = $region21
    $region20: #{mlp_forward.1} parent=1 // pred_region
      _
    $region21: #{mlp_forward.1} parent=1 // pred_fallthru
      _
    // Predicated region
    $region22: #{mlp_forward.1} parent=1 // pred_check
      _
    $region23: #{mlp_forward.1} parent=1 // pred_check_branch
      %32 = sbr.rel (0) target = $region25
    $region24: #{mlp_forward.1} parent=1 // pred_region
      _
    $region25: #{mlp_forward.1} parent=1 // pred_fallthru
      _
    // Predicated region
    $region26: #{mlp_forward.1} parent=1 // pred_check
      _
    $region27: #{mlp_forward.1} parent=1 // pred_check_branch
      %34 = sbr.rel (0) target = $region29
    $region28: #{mlp_forward.1} parent=1 // pred_region
      _
    $region29: #{mlp_forward.1} parent=1 // pred_fallthru
      _
    // Predicated region
    $region30: #{mlp_forward.1} parent=1 // pred_check
      _
    $region31: #{mlp_forward.1} parent=1 // pred_check_branch
      %36 = sbr.rel (0) target = $region33
    $region32: #{mlp_forward.1} parent=1 // pred_region
      _
    $region33: #{mlp_forward.1} parent=1 // pred_fallthru
      _
    // Predicated region
    $region34: #{mlp_forward.1} parent=1 // pred_check
      _
    $region35: #{mlp_forward.1} parent=1 // pred_check_branch
      %38 = sbr.rel (0) target = $region37
    $region36: #{mlp_forward.1} parent=1 // pred_region
      _
    $region37: #{mlp_forward.1} parent=1 // pred_fallthru
      _
    // Predicated region
    $region38: #{mlp_forward.1} parent=1 // pred_check
      _
    $region39: #{mlp_forward.1} parent=1 // pred_check_branch
      %40 = sbr.rel (0) target = $region41
    $region40: #{mlp_forward.1} parent=1 // pred_region
      _
    $region41: #{mlp_forward.1} parent=1 // pred_fallthru
      _
    // Predicated region
    $region42: #{mlp_forward.1} parent=1 // pred_check
      _
    $region43: #{mlp_forward.1} parent=1 // pred_check_branch
      %42 = sbr.rel (0) target = $region45
    $region44: #{mlp_forward.1} parent=1 // pred_region
      _
    $region45: #{mlp_forward.1} parent=1 // pred_fallthru
      _
    // Predicated region
    $region46: #{mlp_forward.1} parent=1 // pred_check
      _
    $region47: #{mlp_forward.1} parent=1 // pred_check_branch
      %44 = sbr.rel (0) target = $region49
    $region48: #{mlp_forward.1} parent=1 // pred_region
      _
    $region49: #{mlp_forward.1} parent=1 // pred_fallthru
      _
    // Predicated region
    $region50: #{mlp_forward.1} parent=1 // pred_check
      _
    $region51: #{mlp_forward.1} parent=1 // pred_check_branch
      %46 = sbr.rel (0) target = $region53
    $region52: #{mlp_forward.1} parent=1 // pred_region
      _
    $region53: #{mlp_forward.1} parent=1 // pred_fallthru
      _
    %v48 = vld [vmem:[%s0] sm:$0xf]
    %v49 = vld [vmem:[%s2] sm:$0xf]
    %v50 = vld [vmem:[%s2 + $0x4] sm:$0xf]
    %v51 = vld [vmem:[%s2 + $0x8] sm:$0xf]
    %v52 = vld [vmem:[%s2 + $0xc] sm:$0xf]
    %v53 = vld [vmem:[%s1] sm:$0xf]
    %v54 = vld [vmem:[%s3] sm:$0xf]
    %v55 = vld [vmem:[%s3 + $0x4] sm:$0xf]
    %v56 = vld [vmem:[%s3 + $0x8] sm:$0xf]
    %v57 = vld [vmem:[%s3 + $0xc] sm:$0xf]
    %v62 = vunpack.c.l.b16 %v54
    %v63 = vunpack.c.l.b16 %v55
    %v64 = vunpack.c.l.b16 %v56
    %v65 = vunpack.c.l.b16 %v57
    %v66 = vpack.c.b16 %v63, %v62
    %v67 = vpack.c.b16 %v65, %v64
    %vm70 = vcmask 261120
    %v72 = vsel %vm70, %v53, 0
    %74 = vmatprep.subr.bf16.mxu0 0
    %75 = vmatpush1.bf16.msra.mxu0 %v66
    %76 = vmatprep.subr.bf16.mxu0 0
    %77 = vmatpush1.bf16.msra.mxu0 %v67
    %78 = vmatprep.subr.bf16.mxu0 0
    %79 = vmatpush1.bf16.msra.mxu0 0
    %80 = vmatprep.subr.bf16.mxu0 0
    %81 = vmatpush1.bf16.msra.mxu0 0
    %82 = vmatprep.subr.bf16.mxu0 0
    %83 = vmatpush1.bf16.msra.mxu0 0
    %84 = vmatprep.subr.bf16.mxu0 0
    %85 = vmatpush1.bf16.msra.mxu0 0
    %86 = vmatprep.subr.bf16.mxu0 0
    %87 = vmatpush1.bf16.msra.mxu0 0
    %88 = vmatprep.subr.bf16.mxu0 0
    %89 = vmatpush1.bf16.msra.mxu0 0
    %90 = vmatprep.subr.bf16.mxu0 0
    %91 = vmatpush1.bf16.msra.mxu0 0
    %92 = vmatprep.subr.bf16.mxu0 0
    %93 = vmatpush1.bf16.msra.mxu0 0
    %94 = vmatprep.subr.bf16.mxu0 0
    %95 = vmatpush1.bf16.msra.mxu0 0
    %96 = vmatprep.subr.bf16.mxu0 0
    %97 = vmatpush1.bf16.msra.mxu0 0
    %98 = vmatprep.subr.bf16.mxu0 0
    %99 = vmatpush1.bf16.msra.mxu0 0
    %100 = vmatprep.subr.bf16.mxu0 0
    %101 = vmatpush1.bf16.msra.mxu0 0
    %102 = vmatprep.subr.bf16.mxu0 0
    %103 = vmatpush1.bf16.msra.mxu0 0
    %104 = vmatprep.subr.bf16.mxu0 0
    %105 = vmatpush1.bf16.msra.mxu0 0
    %106 = vmatprep.mubr.bf16.mxu0 0
    %107 = vmatmul.mubr.bf16.gmra.mrb[0].mxu0 %v72
    %v108 = vpop.f32.mrb[0].mxu0
    %v109 = vadd.f32 0.0, %v108
    %v110 = vpop.f32.mrb[0].mxu0
    %v111 = vpop.f32.mrb[0].mxu0
    %v112 = vpop.f32.mrb[0].mxu0
    %113 = vdwg.mxu0
    %v118 = vunpack.c.l.b16 %v49
    %v119 = vunpack.c.l.b16 %v50
    %v120 = vunpack.c.l.b16 %v51
    %v121 = vunpack.c.l.b16 %v52
    %v122 = vpack.c.b16 %v119, %v118
    %v123 = vpack.c.b16 %v121, %v120
    %v127 = vsel %vm70, %v48, 0
    %129 = vmatprep.subr.bf16.mxu0 0
    %130 = vmatpush1.bf16.msra.mxu0 %v122
    %131 = vmatprep.subr.bf16.mxu0 0
    %132 = vmatpush1.bf16.msra.mxu0 %v123
    %133 = vmatprep.subr.bf16.mxu0 0
    %134 = vmatpush1.bf16.msra.mxu0 0
    %135 = vmatprep.subr.bf16.mxu0 0
    %136 = vmatpush1.bf16.msra.mxu0 0
    %137 = vmatprep.subr.bf16.mxu0 0
    %138 = vmatpush1.bf16.msra.mxu0 0
    %139 = vmatprep.subr.bf16.mxu0 0
    %140 = vmatpush1.bf16.msra.mxu0 0
    %141 = vmatprep.subr.bf16.mxu0 0
    %142 = vmatpush1.bf16.msra.mxu0 0
    %143 = vmatprep.subr.bf16.mxu0 0
    %144 = vmatpush1.bf16.msra.mxu0 0
    %145 = vmatprep.subr.bf16.mxu0 0
    %146 = vmatpush1.bf16.msra.mxu0 0
    %147 = vmatprep.subr.bf16.mxu0 0
    %148 = vmatpush1.bf16.msra.mxu0 0
    %149 = vmatprep.subr.bf16.mxu0 0
    %150 = vmatpush1.bf16.msra.mxu0 0
    %151 = vmatprep.subr.bf16.mxu0 0
    %152 = vmatpush1.bf16.msra.mxu0 0
    %153 = vmatprep.subr.bf16.mxu0 0
    %154 = vmatpush1.bf16.msra.mxu0 0
    %155 = vmatprep.subr.bf16.mxu0 0
    %156 = vmatpush1.bf16.msra.mxu0 0
    %157 = vmatprep.subr.bf16.mxu0 0
    %158 = vmatpush1.bf16.msra.mxu0 0
    %159 = vmatprep.subr.bf16.mxu0 0
    %160 = vmatpush1.bf16.msra.mxu0 0
    %161 = vmatprep.mubr.bf16.mxu0 0
    %162 = vmatmul.mubr.bf16.gmra.mrb[0].mxu0 %v127
    %v163 = vpop.f32.mrb[0].mxu0
    %v164 = vadd.f32 %v109, %v163
    %v165 = vpop.f32.mrb[0].mxu0
    %v166 = vpop.f32.mrb[0].mxu0
    %v167 = vpop.f32.mrb[0].mxu0
    %168 = vdwg.mxu0
    %v169 = vld [vmem:[%s4] sm:$0x1]
    %v171 = vlaneseq
    %v172 = vshrl.u32 %v171, 7
    %v173 = vsub.s32 0, %v172
    %v174 = vrot.slane %v169, %v173
    %v176 = vadd.f32 %v164, %v174
    %v177 = vmax.f32 %v176, 0.0
    %v178 = vpack.c.bf16 %v177, %v177
    %v179 = vld [vmem:[%s5] sm:$0xf]
    %v180 = vld [vmem:[%s5 + $0x4] sm:$0xf]
    %v181 = vld [vmem:[%s5 + $0x8] sm:$0xf]
    %v182 = vld [vmem:[%s5 + $0xc] sm:$0xf]
    %v183 = vld [vmem:[%s5 + $0x10] sm:$0xf]
    %v184 = vld [vmem:[%s5 + $0x14] sm:$0xf]
    %v185 = vld [vmem:[%s5 + $0x18] sm:$0xf]
    %v186 = vld [vmem:[%s5 + $0x1c] sm:$0xf]
    %v187 = vld [vmem:[%s6] sm:$0x1]
    %v189 = vlaneseq
    %v190 = vshrl.u32 %v189, 7
    %v191 = vsub.s32 0, %v190
    %v192 = vrot.slane %v187, %v191
    %v202 = vunpack.c.l.b16 %v179
    %v203 = vunpack.c.l.b16 %v180
    %v204 = vunpack.c.l.b16 %v181
    %v205 = vunpack.c.l.b16 %v182
    %v206 = vunpack.c.l.b16 %v183
    %v207 = vunpack.c.l.b16 %v184
    %v208 = vunpack.c.l.b16 %v185
    %v209 = vunpack.c.l.b16 %v186
    %v210 = vpack.c.b16 %v203, %v202
    %v211 = vpack.c.b16 %v205, %v204
    %v212 = vpack.c.b16 %v207, %v206
    %v213 = vpack.c.b16 %v209, %v208
    %vm218 = vcmask 523264
    %v220 = vsel %vm218, %v178, 0
    %222 = vmatprep.subr.bf16.mxu0 0
    %223 = vmatpush1.bf16.msra.mxu0 %v210
    %224 = vmatprep.subr.bf16.mxu0 0
    %225 = vmatpush1.bf16.msra.mxu0 %v211
    %226 = vmatprep.subr.bf16.mxu0 0
    %227 = vmatpush1.bf16.msra.mxu0 %v212
    %228 = vmatprep.subr.bf16.mxu0 0
    %229 = vmatpush1.bf16.msra.mxu0 %v213
    %230 = vmatprep.subr.bf16.mxu0 0
    %231 = vmatpush1.bf16.msra.mxu0 0
    %232 = vmatprep.subr.bf16.mxu0 0
    %233 = vmatpush1.bf16.msra.mxu0 0
    %234 = vmatprep.subr.bf16.mxu0 0
    %235 = vmatpush1.bf16.msra.mxu0 0
    %236 = vmatprep.subr.bf16.mxu0 0
    %237 = vmatpush1.bf16.msra.mxu0 0
    %238 = vmatprep.subr.bf16.mxu0 0
    %239 = vmatpush1.bf16.msra.mxu0 0
    %240 = vmatprep.subr.bf16.mxu0 0
    %241 = vmatpush1.bf16.msra.mxu0 0
    %242 = vmatprep.subr.bf16.mxu0 0
    %243 = vmatpush1.bf16.msra.mxu0 0
    %244 = vmatprep.subr.bf16.mxu0 0
    %245 = vmatpush1.bf16.msra.mxu0 0
    %246 = vmatprep.subr.bf16.mxu0 0
    %247 = vmatpush1.bf16.msra.mxu0 0
    %248 = vmatprep.subr.bf16.mxu0 0
    %249 = vmatpush1.bf16.msra.mxu0 0
    %250 = vmatprep.subr.bf16.mxu0 0
    %251 = vmatpush1.bf16.msra.mxu0 0
    %252 = vmatprep.subr.bf16.mxu0 0
    %253 = vmatpush1.bf16.msra.mxu0 0
    %254 = vmatprep.mubr.bf16.mxu0 0
    %255 = vmatmul.mubr.bf16.gmra.mrb[0].mxu0 %v220
    %v256 = vpop.f32.mrb[0].mxu0
    %v257 = vadd.f32 %v192, %v256
    %v258 = vpop.f32.mrb[0].mxu0
    %v259 = vpop.f32.mrb[0].mxu0
    %v260 = vpop.f32.mrb[0].mxu0
    %261 = vdwg.mxu0
    %v262 = vmax.f32 %v257, 0.0
    %v263 = vpack.c.bf16 %v262, %v262
    %v264 = vld [vmem:[%s7] sm:$0xf]
    %v265 = vld [vmem:[%s7 + $0x4] sm:$0xf]
    %v266 = vld [vmem:[%s7 + $0x8] sm:$0xf]
    %v267 = vld [vmem:[%s7 + $0xc] sm:$0xf]
    %v268 = vld [vmem:[%s8] sm:$0x1]
    %v270 = vlaneseq
    %v271 = vshrl.u32 %v270, 7
    %v272 = vsub.s32 0, %v271
    %v273 = vrot.slane %v268, %v272
    %v279 = vunpack.c.l.b16 %v264
    %v280 = vunpack.c.l.b16 %v265
    %v281 = vunpack.c.l.b16 %v266
    %v282 = vunpack.c.l.b16 %v267
    %v283 = vpack.c.b16 %v280, %v279
    %v284 = vpack.c.b16 %v282, %v281
    %v288 = vsel %vm70, %v263, 0
    %290 = vmatprep.subr.bf16.mxu0 0
    %291 = vmatpush1.bf16.msra.mxu0 %v283
    %292 = vmatprep.subr.bf16.mxu0 0
    %293 = vmatpush1.bf16.msra.mxu0 %v284
    %294 = vmatprep.subr.bf16.mxu0 0
    %295 = vmatpush1.bf16.msra.mxu0 0
    %296 = vmatprep.subr.bf16.mxu0 0
    %297 = vmatpush1.bf16.msra.mxu0 0
    %298 = vmatprep.subr.bf16.mxu0 0
    %299 = vmatpush1.bf16.msra.mxu0 0
    %300 = vmatprep.subr.bf16.mxu0 0
    %301 = vmatpush1.bf16.msra.mxu0 0
    %302 = vmatprep.subr.bf16.mxu0 0
    %303 = vmatpush1.bf16.msra.mxu0 0
    %304 = vmatprep.subr.bf16.mxu0 0
    %305 = vmatpush1.bf16.msra.mxu0 0
    %306 = vmatprep.subr.bf16.mxu0 0
    %307 = vmatpush1.bf16.msra.mxu0 0
    %308 = vmatprep.subr.bf16.mxu0 0
    %309 = vmatpush1.bf16.msra.mxu0 0
    %310 = vmatprep.subr.bf16.mxu0 0
    %311 = vmatpush1.bf16.msra.mxu0 0
    %312 = vmatprep.subr.bf16.mxu0 0
    %313 = vmatpush1.bf16.msra.mxu0 0
    %314 = vmatprep.subr.bf16.mxu0 0
    %315 = vmatpush1.bf16.msra.mxu0 0
    %316 = vmatprep.subr.bf16.mxu0 0
    %317 = vmatpush1.bf16.msra.mxu0 0
    %318 = vmatprep.subr.bf16.mxu0 0
    %319 = vmatpush1.bf16.msra.mxu0 0
    %320 = vmatprep.subr.bf16.mxu0 0
    %321 = vmatpush1.bf16.msra.mxu0 0
    %322 = vmatprep.mubr.bf16.mxu0 0
    %323 = vmatmul.mubr.bf16.gmra.mrb[0].mxu0 %v288
    %v324 = vpop.f32.mrb[0].mxu0
    %v325 = vadd.f32 %v273, %v324
    %v326 = vpop.f32.mrb[0].mxu0
    %v327 = vpop.f32.mrb[0].mxu0
    %v328 = vpop.f32.mrb[0].mxu0
    %329 = vdwg.mxu0
    %v330 = vmax.f32 %v325, 0.0
    %v331 = vpack.c.bf16 %v330, %v330
    %v332 = vld [vmem:[%s9] sm:$0xf]
    %v333 = vld [vmem:[%s9 + $0x4] sm:$0xf]
    %v334 = vld [vmem:[%s10] sm:$0x1]
    %v336 = vlaneseq
    %v337 = vshrl.u32 %v336, 7
    %v338 = vsub.s32 0, %v337
    %v339 = vrot.slane %v334, %v338
    %v343 = vunpack.c.l.b16 %v332
    %v344 = vunpack.c.l.b16 %v333
    %v345 = vpack.c.b16 %v344, %v343
    %vm347 = vcmask 130048
    %v349 = vsel %vm347, %v331, 0
    %351 = vmatprep.subr.bf16.mxu0 0
    %352 = vmatpush1.bf16.msra.mxu0 %v345
    %353 = vmatprep.subr.bf16.mxu0 0
    %354 = vmatpush1.bf16.msra.mxu0 0
    %355 = vmatprep.subr.bf16.mxu0 0
    %356 = vmatpush1.bf16.msra.mxu0 0
    %357 = vmatprep.subr.bf16.mxu0 0
    %358 = vmatpush1.bf16.msra.mxu0 0
    %359 = vmatprep.subr.bf16.mxu0 0
    %360 = vmatpush1.bf16.msra.mxu0 0
    %361 = vmatprep.subr.bf16.mxu0 0
    %362 = vmatpush1.bf16.msra.mxu0 0
    %363 = vmatprep.subr.bf16.mxu0 0
    %364 = vmatpush1.bf16.msra.mxu0 0
    %365 = vmatprep.subr.bf16.mxu0 0
    %366 = vmatpush1.bf16.msra.mxu0 0
    %367 = vmatprep.subr.bf16.mxu0 0
    %368 = vmatpush1.bf16.msra.mxu0 0
    %369 = vmatprep.subr.bf16.mxu0 0
    %370 = vmatpush1.bf16.msra.mxu0 0
    %371 = vmatprep.subr.bf16.mxu0 0
    %372 = vmatpush1.bf16.msra.mxu0 0
    %373 = vmatprep.subr.bf16.mxu0 0
    %374 = vmatpush1.bf16.msra.mxu0 0
    %375 = vmatprep.subr.bf16.mxu0 0
    %376 = vmatpush1.bf16.msra.mxu0 0
    %377 = vmatprep.subr.bf16.mxu0 0
    %378 = vmatpush1.bf16.msra.mxu0 0
    %379 = vmatprep.subr.bf16.mxu0 0
    %380 = vmatpush1.bf16.msra.mxu0 0
    %381 = vmatprep.subr.bf16.mxu0 0
    %382 = vmatpush1.bf16.msra.mxu0 0
    %383 = vmatprep.mubr.bf16.mxu0 0
    %384 = vmatmul.mubr.bf16.gmra.mrb[0].mxu0 %v349
    %v385 = vpop.f32.mrb[0].mxu0
    %v386 = vadd.f32 %v339, %v385
    %v387 = vpop.f32.mrb[0].mxu0
    %v388 = vpop.f32.mrb[0].mxu0
    %v389 = vpop.f32.mrb[0].mxu0
    %390 = vdwg.mxu0
    %v391 = vmax.f32 %v386, 0.0
    %v392 = vpack.c.bf16 %v391, %v391
    %v393 = vld [vmem:[%s11] sm:$0xf]
    %vm394 = vcmask 64512
    %v396 = vsel %vm394, %v393, 0
    %v399 = vsel %vm394, %v392, 0
    %401 = vmatprep.subr.bf16.mxu0 0
    %402 = vmatpush1.bf16.xpose.msra.mxu0 %v399
    %403 = vmatprep.subr.bf16.mxu0 0
    %404 = vmatpush1.bf16.xpose.msra.mxu0 0
    %405 = vmatprep.subr.bf16.mxu0 0
    %406 = vmatpush1.bf16.xpose.msra.mxu0 0
    %407 = vmatprep.subr.bf16.mxu0 0
    %408 = vmatpush1.bf16.xpose.msra.mxu0 0
    %409 = vmatprep.subr.bf16.mxu0 0
    %410 = vmatpush1.bf16.xpose.msra.mxu0 0
    %411 = vmatprep.subr.bf16.mxu0 0
    %412 = vmatpush1.bf16.xpose.msra.mxu0 0
    %413 = vmatprep.subr.bf16.mxu0 0
    %414 = vmatpush1.bf16.xpose.msra.mxu0 0
    %415 = vmatprep.subr.bf16.mxu0 0
    %416 = vmatpush1.bf16.xpose.msra.mxu0 0
    %417 = vmatprep.subr.bf16.mxu0 0
    %418 = vmatpush1.bf16.xpose.msra.mxu0 0
    %419 = vmatprep.subr.bf16.mxu0 0
    %420 = vmatpush1.bf16.xpose.msra.mxu0 0
    %421 = vmatprep.subr.bf16.mxu0 0
    %422 = vmatpush1.bf16.xpose.msra.mxu0 0
    %423 = vmatprep.subr.bf16.mxu0 0
    %424 = vmatpush1.bf16.xpose.msra.mxu0 0
    %425 = vmatprep.subr.bf16.mxu0 0
    %426 = vmatpush1.bf16.xpose.msra.mxu0 0
    %427 = vmatprep.subr.bf16.mxu0 0
    %428 = vmatpush1.bf16.xpose.msra.mxu0 0
    %429 = vmatprep.subr.bf16.mxu0 0
    %430 = vmatpush1.bf16.xpose.msra.mxu0 0
    %431 = vmatprep.subr.bf16.mxu0 0
    %432 = vmatpush1.bf16.xpose.msra.mxu0 0
    %433 = vmatprep.mubr.bf16.mxu0 0
    %434 = vmatmul.mubr.bf16.gmra.mrb[0].mxu0 %v396
    %v435 = vpop.f32.mrb[0].mxu0
    %v436 = vadd.f32 0.0, %v435
    %v437 = vpop.f32.mrb[0].mxu0
    %v438 = vpop.f32.mrb[0].mxu0
    %v439 = vpop.f32.mrb[0].mxu0
    %440 = vdwg.mxu0
    %v441 = vld [vmem:[#allocation2] sm:$0x1]
    %443 = vset.pattern.permute.xlu0 0
    %444 = vperm.xlu0 %443, %v441
    %v445 = vpop.permute.xlu0 %444
    %v447 = vlaneseq
    %v448 = vshrl.u32 %v447, 7
    %v449 = vsub.s32 0, %v448
    %v450 = vrot.slane %v445, %v449
    %v451 = vadd.f32 %v436, %v450
    %vm452 = vcmask 57344
    %453 = vst.msk [vmem:[#allocation3] sm:$0x1] %vm452, %v451
    // Predicated region
    $region54: #{mlp_forward.1} parent=1 // pred_check
      _
    $region55: #{mlp_forward.1} parent=1 // pred_check_branch
      %455 = sbr.rel (0) target = $region57
    $region56: #{mlp_forward.1} parent=1 // pred_region
      %s457 = ssub.s32 16, 16
      %458 = vsyncadd [#allocation4], %s457
      %s460 = sshll.u32 [#allocation3], 4
      %s461 = int_to_ptr.vmem [resolvable:$true] %s460
      %463 = dma.vmem_to_hbm [thread:$0]  %s461, 16, %s13, [#allocation4]
    $region57: #{mlp_forward.1} parent=1 // pred_fallthru
      _
    // Predicated region
    $region58: #{mlp_forward.1} parent=1 // pred_check
      _
    $region59: #{mlp_forward.1} parent=1 // pred_check_branch
      %465 = sbr.rel (0) target = $region61
    $region60: #{mlp_forward.1} parent=1 // pred_region
      %466 = dma.done [#allocation4], 16
    $region61: #{mlp_forward.1} parent=1 // pred_fallthru
      _
    %467 = vsyncpa [#allocation4], 1

</llo_original>
